<compile_context>
chip_gen: v6e
topology: v6e:2x2x1
jax: 0.10.0
libtpu: 0.0.40
codegen_flags: <defaults>
</compile_context>

<pallas_src>
import math
from functools import partial

import numpy as np
import jax
import jax.numpy as jnp
from jax.experimental import pallas as pl
from jax.experimental.pallas import tpu as pltpu


def _round_up(x: int, m: int) -> int:
    return ((x + m - 1) // m) * m


def _row_align(*dtypes) -> int:
    # sublane packing: 4-byte -> 8 rows, 2-byte -> 16, 1-byte -> 32
    itemsize = min(np.dtype(d).itemsize for d in dtypes)
    return max(8, 32 // itemsize)


def _fused_linear_se3_kernel(*refs, num_degrees, compute_dtype):
    # refs layout: [x_0, w_0, x_1, w_1, ..., x_{G-1}, w_{G-1}, o_0, ..., o_{G-1}]
    n = num_degrees
    for g in range(n):
        x_ref = refs[2 * g]          # (tile, D*M)  lane-dense activations
        w_ref = refs[2 * g + 1]      # (D*M, E*M)   block-diagonal weight
        o_ref = refs[2 * n + g]      # (tile, E*M)
        a = x_ref[...]
        w = w_ref[...]
        if compute_dtype is not None:
            a = a.astype(compute_dtype)   # cast only at the MXU input
            w = w.astype(compute_dtype)
        o_ref[...] = jnp.dot(
            a, w, preferred_element_type=jnp.float32
        ).astype(o_ref.dtype)


def linear_se3(x: dict, weights: dict, *, tile_bn: int = 2048,
               out_dtype=None, compute_dtype=None,
               vmem_limit_bytes: int = 48 * 1024 * 1024):
    """Pallas equivalent of LinearSE3.forward.

    x[degree]:       (B, N, D, M) with M = 2*degree + 1
    weights[degree]: (D, E)
    returns out[degree]: (B, N, E, M)
    """
    degrees = list(weights.keys())
    assert degrees, "empty fiber"
    B, N = x[degrees[0]].shape[:2]
    R = B * N

    flat_inputs, meta = [], []
    align = 8
    per_row_vmem = 0     # double-buffered activation/output VMEM bytes per tile row
    fixed_vmem = 0       # replicated weight buffers

    for degree in degrees:
        xd = x[degree]
        wd = weights[degree]
        Bd, Nd, D, M = xd.shape
        assert (Bd, Nd) == (B, N), "all degrees must share (B, N)"
        Dw, E = wd.shape
        assert D == Dw
        od = out_dtype if out_dtype is not None else xd.dtype

        # Free row-major view (no HBM relayout): (B, N, D, M) -> (R, D*M).
        x_flat = xd.reshape(R, D * M)
        # Fold M into a block-diagonal weight: W_exp[d*M+i, e*M+j] = W[d,e]*I[i,j].
        w_exp = jnp.kron(wd, jnp.eye(M, dtype=wd.dtype))          # (D*M, E*M)
        if compute_dtype is not None:
            w_exp = w_exp.astype(compute_dtype)                   # tiny, cheap

        align = max(align, _row_align(x_flat.dtype, od))
        per_row_vmem += 2 * _round_up(D * M, 128) * np.dtype(x_flat.dtype).itemsize
        per_row_vmem += 2 * _round_up(E * M, 128) * np.dtype(od).itemsize
        fixed_vmem += 2 * _round_up(D * M, 8) * _round_up(E * M, 128) \
            * np.dtype(w_exp.dtype).itemsize

        flat_inputs.extend([x_flat, w_exp])
        meta.append((degree, D, M, E, od))

    # Row-tile selection: as large as the VMEM budget allows, but with >= 2
    # balanced grid steps whenever R allows (keeps both v7x TensorCores busy;
    # harmless on single-TC v5e/v6e).
    budget = max(vmem_limit_bytes - fixed_vmem - (2 << 20), 1 << 20)
    tile = min(int(tile_bn), max(budget // max(per_row_vmem, 1), align))
    tile = max(align, _round_up(min(tile, R), align))
    if R > align:
        tile = min(tile, _round_up(pl.cdiv(R, 2), align))
    num_tiles = pl.cdiv(R, tile)

    in_specs, out_shapes, out_specs = [], [], []
    for (degree, D, M, E, od) in meta:
        in_specs.extend([
            # (rows, D*M): rows is a multiple of the sublane packing, last dim
            # equals the full array extent -> satisfies the (8,128) rule; the
            # ragged last row-block is masked by Pallas (no explicit padding).
            pl.BlockSpec((tile, D * M), lambda i: (i, 0)),
            # Tiny replicated weight (constant index_map -> DMA'd once).
            # TODO(synk): pipeline_mode=pl.Buffered(1) would drop the dead
            # second weight buffer; skipped since the saving is a few 10s KiB.
            pl.BlockSpec((D * M, E * M), lambda i: (0, 0)),
        ])
        out_shapes.append(jax.ShapeDtypeStruct((R, E * M), od))
        out_specs.append(pl.BlockSpec((tile, E * M), lambda i: (i, 0)))

    outs_flat = pl.pallas_call(
        partial(_fused_linear_se3_kernel, num_degrees=len(meta),
                compute_dtype=compute_dtype),
        out_shape=tuple(out_shapes),
        grid_spec=pltpu.PrefetchScalarGridSpec(
            num_scalar_prefetch=0,
            grid=(num_tiles,),
            in_specs=in_specs,
            out_specs=list(out_specs),
        ),
        compiler_params=pltpu.CompilerParams(
            dimension_semantics=("parallel",),
            vmem_limit_bytes=int(vmem_limit_bytes),
        ),
    )(*flat_inputs)

    # (R, E*M) -> (B, N, E, M) is a free row-major reshape (no transpose pass).
    out = {}
    for (degree, D, M, E, od), o_flat in zip(meta, outs_flat):
        out[degree] = o_flat.reshape(B, N, E, M)
    return out


def _ref_linear_se3(x: dict, weights: dict) -> dict:
    return {d: jnp.einsum("bndm,de->bnem", x[d], w) for d, w in weights.items()}


if __name__ == "__main__":
    key = jax.random.PRNGKey(0)

    # fiber_in & fiber_out: degrees present in both, with (dim_in, dim_out).
    # degree 0: m = 1, degree 1: m = 3
    fiber = {"0": (32, 16), "1": (16, 8)}
    B, N = 2, 8

    x = {}
    weights = {}
    for degree, (dim_in, dim_out) in fiber.items():
        m = 2 * int(degree) + 1
        key, kx, kw = jax.random.split(key, 3)
        x[degree] = jax.random.normal(kx, (B, N, dim_in, m), dtype=jnp.float32)
        # nn.Parameter(torch.randn(dim_in, dim_out) / sqrt(dim_in))
        weights[degree] = (
            jax.random.normal(kw, (dim_in, dim_out), dtype=jnp.float32)
            / math.sqrt(dim_in)
        )

    ref = _ref_linear_se3(x, weights)

    # Full-precision path (tight tolerance).
    out = linear_se3(x, weights)
    out = jax.tree_util.tree_map(jax.block_until_ready, out)
    for degree in fiber:
        assert out[degree].shape == ref[degree].shape
        err = float(jnp.max(jnp.abs(out[degree] - ref[degree])))
        assert err < 1e-4, f"degree {degree}: max abs err {err}"

    # Low-precision path: bf16 activations supplied by the caller (halves the
    # dominant input HBM bytes), bf16 output stores, f32 MXU accumulation.
    x_bf16 = {d: v.astype(jnp.bfloat16) for d, v in x.items()}
    out_bf16 = linear_se3(x_bf16, weights,
                          compute_dtype=jnp.bfloat16, out_dtype=jnp.bfloat16)
    out_bf16 = jax.tree_util.tree_map(jax.block_until_ready, out_bf16)
    for degree in fiber:
        err = float(jnp.max(jnp.abs(out_bf16[degree].astype(jnp.float32)
                                    - ref[degree])))
        assert err < 2e-1, f"degree {degree} (bf16): max abs err {err}"

    print("KERNEL_OK")
</pallas_src>

<mosaic_0001>
module attributes {stable_mosaic.version = 11 : i64} {
  func.func @_fused_linear_se3_kernel(%arg0: i32, %arg1: memref<8x32xf32, #tpu.memory_space<vmem>>, %arg2: memref<32x16xf32, #tpu.memory_space<vmem>>, %arg3: memref<8x48xf32, #tpu.memory_space<vmem>>, %arg4: memref<48x24xf32, #tpu.memory_space<vmem>>, %arg5: memref<8x16xf32, #tpu.memory_space<vmem>>, %arg6: memref<8x24xf32, #tpu.memory_space<vmem>>) attributes {dimension_semantics = [#tpu.dimension_semantics<parallel>], iteration_bounds = array<i64: 2>, scalar_prefetch = 0 : i64, scratch_operands = 0 : i64, tpu.core_type = #tpu.core_type<tc>, window_params = [{transform_indices = @transform_0, window_bounds = array<i64: 8, 32>}, {pipeline_mode = #tpu.pipeline_mode<synchronous>, transform_indices = @transform_1, window_bounds = array<i64: 32, 16>}, {transform_indices = @transform_2, window_bounds = array<i64: 8, 48>}, {pipeline_mode = #tpu.pipeline_mode<synchronous>, transform_indices = @transform_3, window_bounds = array<i64: 48, 24>}, {transform_indices = @transform_4, window_bounds = array<i64: 8, 16>}, {transform_indices = @transform_5, window_bounds = array<i64: 8, 24>}]} {
    %c0 = arith.constant 0 : index
    %c0_0 = arith.constant 0 : index
    %0 = vector.load %arg1[%c0, %c0_0] : memref<8x32xf32, #tpu.memory_space<vmem>>, vector<8x32xf32>
    %c0_1 = arith.constant 0 : index
    %c0_2 = arith.constant 0 : index
    %1 = vector.load %arg2[%c0_1, %c0_2] : memref<32x16xf32, #tpu.memory_space<vmem>>, vector<32x16xf32>
    %cst = arith.constant dense<0.000000e+00> : vector<8x16xf32>
    %2 = tpu.matmul %0, %1, %cst {dimension_numbers = #tpu.dot_dimension_numbers<[1], [0], [0], [1], [0, 0, 1, 1], [], []>} : vector<8x32xf32>, vector<32x16xf32>, vector<8x16xf32> -> vector<8x16xf32>
    %c0_3 = arith.constant 0 : index
    %c0_4 = arith.constant 0 : index
    %3 = vector.load %arg5[%c0_3, %c0_4] : memref<8x16xf32, #tpu.memory_space<vmem>>, vector<8x16xf32>
    tpu.vector_store %arg5[%c0_3, %c0_4], %2 {strides = array<i32>} : memref<8x16xf32, #tpu.memory_space<vmem>>, vector<8x16xf32>,
    %c0_5 = arith.constant 0 : index
    %c0_6 = arith.constant 0 : index
    %4 = vector.load %arg3[%c0_5, %c0_6] : memref<8x48xf32, #tpu.memory_space<vmem>>, vector<8x48xf32>
    %c0_7 = arith.constant 0 : index
    %c0_8 = arith.constant 0 : index
    %5 = vector.load %arg4[%c0_7, %c0_8] : memref<48x24xf32, #tpu.memory_space<vmem>>, vector<48x24xf32>
    %cst_9 = arith.constant dense<0.000000e+00> : vector<8x24xf32>
    %6 = tpu.matmul %4, %5, %cst_9 {dimension_numbers = #tpu.dot_dimension_numbers<[1], [0], [0], [1], [0, 0, 1, 1], [], []>} : vector<8x48xf32>, vector<48x24xf32>, vector<8x24xf32> -> vector<8x24xf32>
    %c0_10 = arith.constant 0 : index
    %c0_11 = arith.constant 0 : index
    %7 = vector.load %arg6[%c0_10, %c0_11] : memref<8x24xf32, #tpu.memory_space<vmem>>, vector<8x24xf32>
    tpu.vector_store %arg6[%c0_10, %c0_11], %6 {strides = array<i32>} : memref<8x24xf32, #tpu.memory_space<vmem>>, vector<8x24xf32>,
    return
  }
  func.func @transform_0(%arg0: i32) -> (i32, i32) {
    %c0_i32 = arith.constant 0 : i32
    %c0_i32_0 = arith.constant 0 : i32
    return %arg0, %c0_i32 : i32, i32
  }
  func.func @transform_1(%arg0: i32) -> (i32, i32) {
    %c0_i32 = arith.constant 0 : i32
    %c0_i32_0 = arith.constant 0 : i32
    %c0_i32_1 = arith.constant 0 : i32
    return %c0_i32, %c0_i32_0 : i32, i32
  }
  func.func @transform_2(%arg0: i32) -> (i32, i32) {
    %c0_i32 = arith.constant 0 : i32
    %c0_i32_0 = arith.constant 0 : i32
    return %arg0, %c0_i32 : i32, i32
  }
  func.func @transform_3(%arg0: i32) -> (i32, i32) {
    %c0_i32 = arith.constant 0 : i32
    %c0_i32_0 = arith.constant 0 : i32
    %c0_i32_1 = arith.constant 0 : i32
    return %c0_i32, %c0_i32_0 : i32, i32
  }
  func.func @transform_4(%arg0: i32) -> (i32, i32) {
    %c0_i32 = arith.constant 0 : i32
    %c0_i32_0 = arith.constant 0 : i32
    return %arg0, %c0_i32 : i32, i32
  }
  func.func @transform_5(%arg0: i32) -> (i32, i32) {
    %c0_i32 = arith.constant 0 : i32
    %c0_i32_0 = arith.constant 0 : i32
    return %arg0, %c0_i32 : i32, i32
  }
}

</mosaic_0001>

<llo_original>
// kernel: tpu_custom_call.1
$region0: #{tpu_custom_call.1}
  #allocation0 [shape = 'u32[]', space=smem, size = 0x4, offset = 0x4, fixed_abs, tag = 'smem constant byte address 0x4 - core index']
  #allocation1 [shape = 'u32[144,128]{1,0:T(1,128)}', space=vmem, size = 0x12000, scoped, tag = 'internal scratch']
  %s0 = inlined_call_operand.vmem [shape: f32[16,32], index: 0, kind: input, shape index: {}]
  %s1 = inlined_call_operand.vmem [shape: f32[32,16], index: 1, kind: input, shape index: {}]
  %s2 = inlined_call_operand.vmem [shape: f32[16,48], index: 2, kind: input, shape index: {}]
  %s3 = inlined_call_operand.vmem [shape: f32[48,24], index: 3, kind: input, shape index: {}]
  %s4 = inlined_call_operand.hbm [shape: f32[16,16], index: 4, kind: output, shape index: {0}]
  %s5 = inlined_call_operand.hbm [shape: f32[16,24], index: 5, kind: output, shape index: {1}]
  %6 = xla_tuple %s4, %s5
  %s7 = sld [smem:[#allocation0]]
  $region57: #{tpu_custom_call.1} parent=0
    _
  %s9 = ssub.s32 1, %s7
  %s10 = scalar_select 0, %s9, %s7
  $region1: #{tpu_custom_call.1} parent=0
    #allocation2 [shape = 'u8[8192]{0}', space=vmem, size = 0x2000, scoped, tag = 'output window, operand 0']
    #allocation3 [shape = 's32[2]{0}', space=sflag, size = 0x8, scoped, tag = 'scoped memory for tpu_custom_call.1']
    #allocation4 [shape = 'u8[8192]{0}', space=vmem, size = 0x2000, scoped, tag = 'output window, operand 1']
    #allocation5 [shape = 's32[2]{0}', space=sflag, size = 0x8, scoped, tag = 'scoped memory for tpu_custom_call.1']
    %11 = vsyncpa [#allocation3], 0
    %s12 = scalar_lea.sflag [#allocation3], 1
    %13 = vsyncpa %s12, 0
    %14 = vsyncpa [#allocation5], 0
    %s15 = scalar_lea.sflag [#allocation5], 1
    %16 = vsyncpa %s15, 0
    loop: start=0, step=1, limit=4
    $region2: #{tpu_custom_call.1} parent=1 // loop_pre_header
      _
    $region3: #{tpu_custom_call.1} parent=1 // loop_header
      %s18 = sphi 0, %s22
      %p19 = scmp.ge.s32.totalorder %s18, 4
      %s28 = sphi 0, %s30
      %s31 = sphi 0, %s28
      %s32 = sphi 0, %s31
      %s48 = sphi 0, %s32
      %s52 = sphi 0, %s52
      %s54 = sphi 0, %s52
      %s55 = sphi 0, %s54
      %s69 = sphi 0, %s55
      %s75 = sphi 0, %s77
      %s78 = sphi 0, %s75
      %s79 = sphi 0, %s78
      %s95 = sphi 0, %s79
      %s99 = sphi 0, %s99
      %s101 = sphi 0, %s99
      %s102 = sphi 0, %s101
      %s116 = sphi 0, %s102
      %s122 = sphi 0, %s124
      %s125 = sphi 0, %s122
      %s126 = sphi 0, %s125
      %s142 = sphi 0, %s126
      %s148 = sphi 0, %s150
      %s151 = sphi 0, %s148
      %s152 = sphi 0, %s151
      %s168 = sphi 0, %s152
    $region4: #{tpu_custom_call.1} parent=1 // loop_header_branch
      %21 = sbr.rel (%p19) target = $region8
    $region5: #{tpu_custom_call.1} parent=1 // loop_body
      %s23 = ssub.s32 %s18, 1
      %s24 = ssub.s32 %s18, 2
      %s25 = sadd.s32 %s18, 1
      %s26 = ssub.s32 %s18, %s25
      %p27 = scmp.eq.s32.totalorder %s26, 0
      %s29 = sadd.s32 %s28, 1
      %s30 = scalar_select %p27, %s28, %s29
      %p33 = pneg %p27
      %p34 = scmp.eq.s32.totalorder %s18, 1
      %p35 = por %p33, %p34
      %p36 = scmp.ne.s32.totalorder %s28, %s31
      %p37 = scmp.eq.s32.totalorder %s18, 0
      %p38 = por %p36, %p37
      %p39 = scmp.ne.s32.totalorder %s28, %s31
      %p40 = scmp.eq.s32.totalorder %s23, 1
      %p41 = por %p39, %p40
      %p42 = scmp.ne.s32.totalorder %s31, %s32
      %p43 = scmp.eq.s32.totalorder %s23, 0
      %p44 = por %p42, %p43
      %p45 = scmp.ne.s32.totalorder %s31, %s32
      %p46 = scmp.eq.s32.totalorder %s24, 1
      %p47 = por %p45, %p46
      %p49 = scmp.ne.s32.totalorder %s32, %s48
      %p50 = scmp.eq.s32.totalorder %s24, 0
      %p51 = por %p49, %p50
      %s53 = sadd.s32 %s52, 1
      %p56 = scmp.eq.s32.totalorder %s18, 1
      %p57 = scmp.ne.s32.totalorder %s52, %s54
      %p58 = scmp.eq.s32.totalorder %s18, 0
      %p59 = por %p57, %p58
      %p60 = scmp.ne.s32.totalorder %s52, %s54
      %p61 = scmp.eq.s32.totalorder %s23, 1
      %p62 = por %p60, %p61
      %p63 = scmp.ne.s32.totalorder %s54, %s55
      %p64 = scmp.eq.s32.totalorder %s23, 0
      %p65 = por %p63, %p64
      %p66 = scmp.ne.s32.totalorder %s54, %s55
      %p67 = scmp.eq.s32.totalorder %s24, 1
      %p68 = por %p66, %p67
      %p70 = scmp.ne.s32.totalorder %s55, %s69
      %p71 = scmp.eq.s32.totalorder %s24, 0
      %p72 = por %p70, %p71
      %s73 = ssub.s32 %s18, %s25
      %p74 = scmp.eq.s32.totalorder %s73, 0
      %s76 = sadd.s32 %s75, 1
      %s77 = scalar_select %p74, %s75, %s76
      %p80 = pneg %p74
      %p81 = scmp.eq.s32.totalorder %s18, 1
      %p82 = por %p80, %p81
      %p83 = scmp.ne.s32.totalorder %s75, %s78
      %p84 = scmp.eq.s32.totalorder %s18, 0
      %p85 = por %p83, %p84
      %p86 = scmp.ne.s32.totalorder %s75, %s78
      %p87 = scmp.eq.s32.totalorder %s23, 1
      %p88 = por %p86, %p87
      %p89 = scmp.ne.s32.totalorder %s78, %s79
      %p90 = scmp.eq.s32.totalorder %s23, 0
      %p91 = por %p89, %p90
      %p92 = scmp.ne.s32.totalorder %s78, %s79
      %p93 = scmp.eq.s32.totalorder %s24, 1
      %p94 = por %p92, %p93
      %p96 = scmp.ne.s32.totalorder %s79, %s95
      %p97 = scmp.eq.s32.totalorder %s24, 0
      %p98 = por %p96, %p97
      %s100 = sadd.s32 %s99, 1
      %p103 = scmp.eq.s32.totalorder %s18, 1
      %p104 = scmp.ne.s32.totalorder %s99, %s101
      %p105 = scmp.eq.s32.totalorder %s18, 0
      %p106 = por %p104, %p105
      %p107 = scmp.ne.s32.totalorder %s99, %s101
      %p108 = scmp.eq.s32.totalorder %s23, 1
      %p109 = por %p107, %p108
      %p110 = scmp.ne.s32.totalorder %s101, %s102
      %p111 = scmp.eq.s32.totalorder %s23, 0
      %p112 = por %p110, %p111
      %p113 = scmp.ne.s32.totalorder %s101, %s102
      %p114 = scmp.eq.s32.totalorder %s24, 1
      %p115 = por %p113, %p114
      %p117 = scmp.ne.s32.totalorder %s102, %s116
      %p118 = scmp.eq.s32.totalorder %s24, 0
      %p119 = por %p117, %p118
      %s120 = ssub.s32 %s18, %s25
      %p121 = scmp.eq.s32.totalorder %s120, 0
      %s123 = sadd.s32 %s122, 1
      %s124 = scalar_select %p121, %s122, %s123
      %p127 = pneg %p121
      %p128 = scmp.eq.s32.totalorder %s18, 1
      %p129 = por %p127, %p128
      %p130 = scmp.ne.s32.totalorder %s122, %s125
      %p131 = scmp.eq.s32.totalorder %s18, 0
      %p132 = por %p130, %p131
      %p133 = scmp.ne.s32.totalorder %s122, %s125
      %p134 = scmp.eq.s32.totalorder %s23, 1
      %p135 = por %p133, %p134
      %p136 = scmp.ne.s32.totalorder %s125, %s126
      %p137 = scmp.eq.s32.totalorder %s23, 0
      %p138 = por %p136, %p137
      %p139 = scmp.ne.s32.totalorder %s125, %s126
      %p140 = scmp.eq.s32.totalorder %s24, 1
      %p141 = por %p139, %p140
      %p143 = scmp.ne.s32.totalorder %s126, %s142
      %p144 = scmp.eq.s32.totalorder %s24, 0
      %p145 = por %p143, %p144
      %s146 = ssub.s32 %s18, %s25
      %p147 = scmp.eq.s32.totalorder %s146, 0
      %s149 = sadd.s32 %s148, 1
      %s150 = scalar_select %p147, %s148, %s149
      %p153 = pneg %p147
      %p154 = scmp.eq.s32.totalorder %s18, 1
      %p155 = por %p153, %p154
      %p156 = scmp.ne.s32.totalorder %s148, %s151
      %p157 = scmp.eq.s32.totalorder %s18, 0
      %p158 = por %p156, %p157
      %p159 = scmp.ne.s32.totalorder %s148, %s151
      %p160 = scmp.eq.s32.totalorder %s23, 1
      %p161 = por %p159, %p160
      %p162 = scmp.ne.s32.totalorder %s151, %s152
      %p163 = scmp.eq.s32.totalorder %s23, 0
      %p164 = por %p162, %p163
      %p165 = scmp.ne.s32.totalorder %s151, %s152
      %p166 = scmp.eq.s32.totalorder %s24, 1
      %p167 = por %p165, %p166
      %p169 = scmp.ne.s32.totalorder %s152, %s168
      %p170 = scmp.eq.s32.totalorder %s24, 0
      %p171 = por %p169, %p170
      %p172 = scmp.le.s32.totalorder 1, %s18
      %p173 = scmp.lt.s32.totalorder %s18, 3
      %p174 = pnand %p172, %p173
      %p175 = pneg %p174
      // Predicated region
      $region9: #{tpu_custom_call.1} parent=5 // pred_check
        _
      $region10: #{tpu_custom_call.1} parent=5 // pred_check_branch
        %177 = sbr.rel (%p174) target = $region12
      $region11: #{tpu_custom_call.1} parent=5 // pred_region
        %s178 = ssub.s32 %s18, 1
        // Predicated region
        $region13: #{tpu_custom_call.1} parent=11 // pred_check
          %p179 = pneg %p65
        $region14: #{tpu_custom_call.1} parent=11 // pred_check_branch
          %181 = sbr.rel (%p179) target = $region16
        $region15: #{tpu_custom_call.1} parent=11 // pred_region
          _
        $region16: #{tpu_custom_call.1} parent=11 // pred_fallthru
          _
        // Predicated region
        $region17: #{tpu_custom_call.1} parent=11 // pred_check
          %p182 = pneg %p112
        $region18: #{tpu_custom_call.1} parent=11 // pred_check_branch
          %184 = sbr.rel (%p182) target = $region20
        $region19: #{tpu_custom_call.1} parent=11 // pred_region
          _
        $region20: #{tpu_custom_call.1} parent=11 // pred_fallthru
          _
      $region12: #{tpu_custom_call.1} parent=5 // pred_fallthru
        _
      %p185 = scmp.lt.s32.totalorder %s18, 2
      // Predicated region
      $region21: #{tpu_custom_call.1} parent=5 // pred_check
        %p186 = pneg %p185
      $region22: #{tpu_custom_call.1} parent=5 // pred_check_branch
        %188 = sbr.rel (%p186) target = $region24
      $region23: #{tpu_custom_call.1} parent=5 // pred_region
        // Predicated region
        $region25: #{tpu_custom_call.1} parent=23 // pred_check
          %p189 = pneg %p38
        $region26: #{tpu_custom_call.1} parent=23 // pred_check_branch
          %191 = sbr.rel (%p189) target = $region28
        $region27: #{tpu_custom_call.1} parent=23 // pred_region
          %p192 = scmp.lt.s32.totalorder %s18, 1
          %s193 = scalar_select %p192, %s18, 1
          %s194 = smul.addr %s193, 8
          %s195 = scalar_lea.vmem %s0, %s194
        $region28: #{tpu_custom_call.1} parent=23 // pred_fallthru
          _
        // Predicated region
        $region29: #{tpu_custom_call.1} parent=23 // pred_check
          %p196 = pneg %p85
        $region30: #{tpu_custom_call.1} parent=23 // pred_check_branch
          %198 = sbr.rel (%p196) target = $region32
        $region31: #{tpu_custom_call.1} parent=23 // pred_region
          %p199 = scmp.lt.s32.totalorder %s18, 1
          %s200 = scalar_select %p199, %s18, 1
          %s201 = smul.addr %s200, 8
          %s202 = scalar_lea.vmem %s2, %s201
        $region32: #{tpu_custom_call.1} parent=23 // pred_fallthru
          _
      $region24: #{tpu_custom_call.1} parent=5 // pred_fallthru
        _
      %p203 = scmp.le.s32.totalorder 1, %s18
      %p204 = scmp.lt.s32.totalorder %s18, 3
      %p205 = pnand %p203, %p204
      %p206 = pneg %p205
      // Predicated region
      $region33: #{tpu_custom_call.1} parent=5 // pred_check
        _
      $region34: #{tpu_custom_call.1} parent=5 // pred_check_branch
        %208 = sbr.rel (%p205) target = $region36
      $region35: #{tpu_custom_call.1} parent=5 // pred_region
        %s209 = ssub.s32 %s18, 1
        %p210 = scmp.lt.s32.totalorder %s23, 1
        %s211 = scalar_select %p210, %s23, 1
        %s212 = smul.addr %s211, 8
        %s213 = scalar_lea.vmem %s0, %s212
        %p214 = pneg %p44
        %p215 = pneg %p41
        %p216 = pneg %p65
        %p217 = pneg %p62
        %p218 = scmp.lt.s32.totalorder %s23, 1
        %s219 = scalar_select %p218, %s23, 1
        %s220 = smul.addr %s219, 8
        %s221 = scalar_lea.vmem %s2, %s220
        %p222 = pneg %p91
        %p223 = pneg %p88
        %p224 = pneg %p112
        %p225 = pneg %p109
        %p226 = pneg %p138
        %p227 = pneg %p135
        %s228 = sand.u32 %s125, 1
        %s229 = scalar_lea.sflag [#allocation3], %s228
        %s230 = sand.u32 %s125, 1
        %s231 = smul.addr %s230, 8
        %s232 = scalar_lea.vmem [#allocation2], %s231
        %p233 = pneg %p164
        %p234 = pneg %p161
        %s235 = sand.u32 %s151, 1
        %s236 = scalar_lea.sflag [#allocation5], %s235
        %s237 = sand.u32 %s151, 1
        %s238 = smul.addr %s237, 8
        %s239 = scalar_lea.vmem [#allocation4], %s238
        %p240 = scmp.lt.s32.totalorder %s23, 1
        %s241 = scalar_select %p240, %s23, 1
        %s242 = smul.addr %s241, 8
        %s243 = scalar_lea.vmem %s0, %s242
        %p244 = scmp.lt.s32.totalorder %s23, 1
        %s245 = scalar_select %p244, %s23, 1
        %s246 = smul.addr %s245, 8
        %s247 = scalar_lea.vmem %s2, %s246
        %v248 = vld [vmem:[%s243] sm:$0xff]
        %v249 = vld [vmem:[%s1] sm:$0xff]
        %v250 = vld [vmem:[%s1 + $0x8] sm:$0xff]
        %v251 = vld [vmem:[%s1 + $0x10] sm:$0xff]
        %v252 = vld [vmem:[%s1 + $0x18] sm:$0xff]
        %vm253 = vcmask 261120
        %v255 = vsel %vm253, %v248, 0
        %257 = vmatprep.subr.mxu0 0.0
        %258 = vmatpush1.msra.mxu0 0.0
        %259 = vmatprep.subr.mxu0 0.0
        %260 = vmatpush1.msra.mxu0 0.0
        %261 = vmatprep.subr.mxu0 0.0
        %262 = vmatpush1.msra.mxu0 0.0
        %263 = vmatprep.subr.mxu0 0.0
        %264 = vmatpush1.msra.mxu0 0.0
        %265 = vmatprep.subr.mxu0 0.0
        %266 = vmatpush1.msra.mxu0 0.0
        %267 = vmatprep.subr.mxu0 0.0
        %268 = vmatpush1.msra.mxu0 0.0
        %269 = vmatprep.subr.mxu0 0.0
        %270 = vmatpush1.msra.mxu0 0.0
        %271 = vmatprep.subr.mxu0 0.0
        %272 = vmatpush1.msra.mxu0 0.0
        %273 = vmatprep.subr.mxu0 0.0
        %274 = vmatpush1.msra.mxu0 0.0
        %275 = vmatprep.subr.mxu0 0.0
        %276 = vmatpush1.msra.mxu0 0.0
        %277 = vmatprep.subr.mxu0 0.0
        %278 = vmatpush1.msra.mxu0 0.0
        %279 = vmatprep.subr.mxu0 0.0
        %280 = vmatpush1.msra.mxu0 0.0
        %281 = vmatprep.subr.mxu0 0.0
        %282 = vmatpush1.msra.mxu0 %v252
        %283 = vmatprep.subr.mxu0 0.0
        %284 = vmatpush1.msra.mxu0 %v251
        %285 = vmatprep.subr.mxu0 0.0
        %286 = vmatpush1.msra.mxu0 %v250
        %287 = vmatprep.subr.mxu0 0.0
        %288 = vmatpush1.msra.mxu0 %v249
        %289 = vmatprep.subr.mxu0 0.0
        %290 = vmatpush2.msra.mxu0 0.0
        %291 = vmatprep.subr.mxu0 0.0
        %292 = vmatpush2.msra.mxu0 0.0
        %293 = vmatprep.subr.mxu0 0.0
        %294 = vmatpush2.msra.mxu0 0.0
        %295 = vmatprep.subr.mxu0 0.0
        %296 = vmatpush2.msra.mxu0 0.0
        %297 = vmatprep.subr.mxu0 0.0
        %298 = vmatpush2.msra.mxu0 0.0
        %299 = vmatprep.subr.mxu0 0.0
        %300 = vmatpush2.msra.mxu0 0.0
        %301 = vmatprep.subr.mxu0 0.0
        %302 = vmatpush2.msra.mxu0 0.0
        %303 = vmatprep.subr.mxu0 0.0
        %304 = vmatpush2.msra.mxu0 0.0
        %305 = vmatprep.subr.mxu0 0.0
        %306 = vmatpush2.msra.mxu0 0.0
        %307 = vmatprep.subr.mxu0 0.0
        %308 = vmatpush2.msra.mxu0 0.0
        %309 = vmatprep.subr.mxu0 0.0
        %310 = vmatpush2.msra.mxu0 0.0
        %311 = vmatprep.subr.mxu0 0.0
        %312 = vmatpush2.msra.mxu0 0.0
        %313 = vmatprep.subr.mxu0 0.0
        %314 = vmatpush2.msra.mxu0 0.0
        %315 = vmatprep.subr.mxu0 0.0
        %316 = vmatpush2.msra.mxu0 0.0
        %317 = vmatprep.subr.mxu0 0.0
        %318 = vmatpush2.msra.mxu0 0.0
        %319 = vmatprep.subr.mxu0 0.0
        %320 = vmatpush2.msra.mxu0 0.0
        %321 = vmatprep.mubr.f32.mxu0 0.0
        %322 = vmatmul.mubr.f32.gmra.mxu0 %v255
        %v323 = vpop.f32.mrf.mxu0
        %v324 = vadd.f32 0.0, %v323
        %v325 = vpop.f32.mrf.mxu0
        %326 = vdwg.mxu0
        %vm327 = vcmask 130048
        %328 = vst.msk [vmem:[%s232] sm:$0xff] %vm327, %v324
        %v329 = vld [vmem:[%s247] sm:$0xff]
        %v330 = vld [vmem:[%s3] sm:$0xff]
        %v331 = vld [vmem:[%s3 + $0x8] sm:$0xff]
        %v332 = vld [vmem:[%s3 + $0x10] sm:$0xff]
        %v333 = vld [vmem:[%s3 + $0x18] sm:$0xff]
        %v334 = vld [vmem:[%s3 + $0x20] sm:$0xff]
        %v335 = vld [vmem:[%s3 + $0x28] sm:$0xff]
        %vm336 = vcmask 392192
        %v338 = vsel %vm336, %v329, 0
        %340 = vmatprep.subr.mxu0 0.0
        %341 = vmatpush1.msra.mxu0 0.0
        %342 = vmatprep.subr.mxu0 0.0
        %343 = vmatpush1.msra.mxu0 0.0
        %344 = vmatprep.subr.mxu0 0.0
        %345 = vmatpush1.msra.mxu0 0.0
        %346 = vmatprep.subr.mxu0 0.0
        %347 = vmatpush1.msra.mxu0 0.0
        %348 = vmatprep.subr.mxu0 0.0
        %349 = vmatpush1.msra.mxu0 0.0
        %350 = vmatprep.subr.mxu0 0.0
        %351 = vmatpush1.msra.mxu0 0.0
        %352 = vmatprep.subr.mxu0 0.0
        %353 = vmatpush1.msra.mxu0 0.0
        %354 = vmatprep.subr.mxu0 0.0
        %355 = vmatpush1.msra.mxu0 0.0
        %356 = vmatprep.subr.mxu0 0.0
        %357 = vmatpush1.msra.mxu0 0.0
        %358 = vmatprep.subr.mxu0 0.0
        %359 = vmatpush1.msra.mxu0 0.0
        %360 = vmatprep.subr.mxu0 0.0
        %361 = vmatpush1.msra.mxu0 %v335
        %362 = vmatprep.subr.mxu0 0.0
        %363 = vmatpush1.msra.mxu0 %v334
        %364 = vmatprep.subr.mxu0 0.0
        %365 = vmatpush1.msra.mxu0 %v333
        %366 = vmatprep.subr.mxu0 0.0
        %367 = vmatpush1.msra.mxu0 %v332
        %368 = vmatprep.subr.mxu0 0.0
        %369 = vmatpush1.msra.mxu0 %v331
        %370 = vmatprep.subr.mxu0 0.0
        %371 = vmatpush1.msra.mxu0 %v330
        %372 = vmatprep.subr.mxu0 0.0
        %373 = vmatpush2.msra.mxu0 0.0
        %374 = vmatprep.subr.mxu0 0.0
        %375 = vmatpush2.msra.mxu0 0.0
        %376 = vmatprep.subr.mxu0 0.0
        %377 = vmatpush2.msra.mxu0 0.0
        %378 = vmatprep.subr.mxu0 0.0
        %379 = vmatpush2.msra.mxu0 0.0
        %380 = vmatprep.subr.mxu0 0.0
        %381 = vmatpush2.msra.mxu0 0.0
        %382 = vmatprep.subr.mxu0 0.0
        %383 = vmatpush2.msra.mxu0 0.0
        %384 = vmatprep.subr.mxu0 0.0
        %385 = vmatpush2.msra.mxu0 0.0
        %386 = vmatprep.subr.mxu0 0.0
        %387 = vmatpush2.msra.mxu0 0.0
        %388 = vmatprep.subr.mxu0 0.0
        %389 = vmatpush2.msra.mxu0 0.0
        %390 = vmatprep.subr.mxu0 0.0
        %391 = vmatpush2.msra.mxu0 0.0
        %392 = vmatprep.subr.mxu0 0.0
        %393 = vmatpush2.msra.mxu0 0.0
        %394 = vmatprep.subr.mxu0 0.0
        %395 = vmatpush2.msra.mxu0 0.0
        %396 = vmatprep.subr.mxu0 0.0
        %397 = vmatpush2.msra.mxu0 0.0
        %398 = vmatprep.subr.mxu0 0.0
        %399 = vmatpush2.msra.mxu0 0.0
        %400 = vmatprep.subr.mxu0 0.0
        %401 = vmatpush2.msra.mxu0 0.0
        %402 = vmatprep.subr.mxu0 0.0
        %403 = vmatpush2.msra.mxu0 0.0
        %404 = vmatprep.mubr.f32.mxu0 0.0
        %405 = vmatmul.mubr.f32.gmra.mxu0 %v338
        %v406 = vpop.f32.mrf.mxu0
        %v407 = vadd.f32 0.0, %v406
        %v408 = vpop.f32.mrf.mxu0
        %409 = vdwg.mxu0
        %vm410 = vcmask 195584
        %411 = vst.msk [vmem:[%s239] sm:$0xff] %vm410, %v407
        %s412 = sand.u32 %s125, 1
        %s413 = scalar_lea.sflag [#allocation3], %s412
        %s414 = sand.u32 %s125, 1
        %s415 = smul.addr %s414, 8
        %s416 = scalar_lea.vmem [#allocation2], %s415
        %s417 = sand.u32 %s151, 1
        %s418 = scalar_lea.sflag [#allocation5], %s417
        %s419 = sand.u32 %s151, 1
        %s420 = smul.addr %s419, 8
        %s421 = scalar_lea.vmem [#allocation4], %s420
        // Predicated region
        $region37: #{tpu_custom_call.1} parent=35 // pred_check
          %p422 = pneg %p135
        $region38: #{tpu_custom_call.1} parent=35 // pred_check_branch
          %424 = sbr.rel (%p422) target = $region40
        $region39: #{tpu_custom_call.1} parent=35 // pred_region
          %s426 = ssub.s32 128, 128
          %427 = vsyncadd %s413, %s426
          %s428 = smul.addr %s23, 128
          %s429 = scalar_lea.hbm %s4, %s428
          %s431 = sshll.u32 %s416, 4
          %s432 = int_to_ptr.vmem [resolvable:$true] %s431
          %434 = dma.vmem_to_hbm [thread:$0]  %s432, 128, %s429, %s413
        $region40: #{tpu_custom_call.1} parent=35 // pred_fallthru
          _
        // Predicated region
        $region41: #{tpu_custom_call.1} parent=35 // pred_check
          %p435 = pneg %p161
        $region42: #{tpu_custom_call.1} parent=35 // pred_check_branch
          %437 = sbr.rel (%p435) target = $region44
        $region43: #{tpu_custom_call.1} parent=35 // pred_region
          %s439 = ssub.s32 128, 128
          %440 = vsyncadd %s418, %s439
          %s441 = smul.addr %s23, 128
          %s442 = scalar_lea.hbm %s5, %s441
          %s444 = sshll.u32 %s421, 4
          %s445 = int_to_ptr.vmem [resolvable:$true] %s444
          %447 = dma.vmem_to_hbm [thread:$0]  %s445, 128, %s442, %s418
        $region44: #{tpu_custom_call.1} parent=35 // pred_fallthru
          _
      $region36: #{tpu_custom_call.1} parent=5 // pred_fallthru
        _
      %p448 = scmp.le.s32.totalorder 2, %s18
      // Predicated region
      $region45: #{tpu_custom_call.1} parent=5 // pred_check
        %p449 = pneg %p448
      $region46: #{tpu_custom_call.1} parent=5 // pred_check_branch
        %451 = sbr.rel (%p449) target = $region48
      $region47: #{tpu_custom_call.1} parent=5 // pred_region
        %s452 = ssub.s32 %s18, 2
        // Predicated region
        $region49: #{tpu_custom_call.1} parent=47 // pred_check
          %p453 = pneg %p141
        $region50: #{tpu_custom_call.1} parent=47 // pred_check_branch
          %455 = sbr.rel (%p453) target = $region52
        $region51: #{tpu_custom_call.1} parent=47 // pred_region
          %s456 = sand.u32 %s126, 1
          %s457 = scalar_lea.sflag [#allocation3], %s456
          %s458 = sand.u32 %s126, 1
          %s459 = smul.addr %s458, 8
          %s460 = scalar_lea.vmem [#allocation2], %s459
          %461 = dma.done %s457, 128
        $region52: #{tpu_custom_call.1} parent=47 // pred_fallthru
          _
        // Predicated region
        $region53: #{tpu_custom_call.1} parent=47 // pred_check
          %p462 = pneg %p167
        $region54: #{tpu_custom_call.1} parent=47 // pred_check_branch
          %464 = sbr.rel (%p462) target = $region56
        $region55: #{tpu_custom_call.1} parent=47 // pred_region
          %s465 = sand.u32 %s152, 1
          %s466 = scalar_lea.sflag [#allocation5], %s465
          %s467 = sand.u32 %s152, 1
          %s468 = smul.addr %s467, 8
          %s469 = scalar_lea.vmem [#allocation4], %s468
          %470 = dma.done %s466, 128
        $region56: #{tpu_custom_call.1} parent=47 // pred_fallthru
          _
      $region48: #{tpu_custom_call.1} parent=5 // pred_fallthru
        _
    $region6: #{tpu_custom_call.1} parent=1 // loop_footer
      %s22 = sadd.s32 1, %s18
    $region7: #{tpu_custom_call.1} parent=1 // loop_footer_branch
      %17 = sbr.rel target = $region3
    $region8: #{tpu_custom_call.1} parent=1 // loop_exit
      _
    %471 = vsyncpa [#allocation3], 1
    %s472 = scalar_lea.sflag [#allocation3], 1
    %473 = vsyncpa %s472, 1
    %474 = vsyncpa [#allocation5], 1
    %s475 = scalar_lea.sflag [#allocation5], 1
    %476 = vsyncpa %s475, 1

</llo_original>
